<compile_context>
chip_gen: v7x
topology: tpu7x:2x2x1
jax: 0.10.0
libtpu: 0.0.40
codegen_flags: <defaults>
</compile_context>

<pallas_src>
import jax
import jax.numpy as jnp
from jax.experimental import pallas as pl
from jax.experimental.pallas import tpu as pltpu

_TARGET_BLOCK_BYTES = 2 * 1024 * 1024      # ~2 MiB per block in native dtype
_FLAT_BLOCK_ELEMS = 64 * 1024              # block size for the rare 1-D fallback
_LANE_CANDIDATES = (1024, 512, 256, 128)


def _mish_kernel(x_ref, o_ref):
    """mish(x) = x * tanh(softplus(x)) = x * u / (u + 2), u = e^{2x} + 2 e^x."""
    x = x_ref[...].astype(jnp.float32)
    t = jnp.exp(jnp.minimum(x, 20.0))   # clamp keeps t*t finite in f32; for
    u = t * (t + 2.0)                   # x >= 20, u + 2 == u exactly, so the
    d = u + 2.0                         # ratio is 1.0 and y == x (PyTorch
                                        # softplus threshold=20 behaviour).
    if jnp.dtype(o_ref.dtype).itemsize <= 2:
        # 16-bit (or narrower) output: approx reciprocal runs on the otherwise
        # idle EUP slot instead of the VALUs (v5e's tightest budget), and its
        # ~1e-4 relative error disappears in the bf16/f16 store rounding.
        y = x * (u * pl.reciprocal(d, approx=True))
    else:
        y = x * (u / d)
    o_ref[...] = y.astype(o_ref.dtype)


def _round_down(x, m):
    return (x // m) * m


def _choose_lane(n):
    """Widest lane extent (multiple of 128) that divides n, else None."""
    for lane in _LANE_CANDIDATES:
        if n % lane == 0:
            return lane
    return None


def _pick_row_block(rows, lane, sublane, max_block_elems):
    """Rows per block: ~2 MiB, multiple of the dtype's sublane tile.

    Does NOT need to divide `rows` -- the grid is cdiv(rows, rb) and Pallas
    masks the partial last block, so no divisor-collapse to tiny blocks.
    """
    if rows <= 2 * sublane:
        return rows                       # tiny: one full-extent block (legal)
    target = max(sublane, _round_down(max_block_elems // lane, sublane))
    # v7x has 2 TensorCores sharing the ("parallel",) grid axis: keep >= 8
    # blocks for large inputs and >= 2 for medium ones so neither core idles.
    # Harmless on v5e/v6e -- blocks stay well past the per-step-overhead knee.
    if rows >= 16 * sublane:
        target = min(target, max(sublane, _round_down(rows // 8, sublane)))
    else:
        target = min(target, max(sublane, _round_down(rows // 2, sublane)))
    return min(target, rows)


def mish(x):
    """Apply Mish elementwise to an arbitrary-shaped array (e.g. NCHW)."""
    orig_shape = x.shape
    dtype = x.dtype
    n = x.size
    if n == 0:
        return x

    itemsize = jnp.dtype(dtype).itemsize
    sublane = max(8, 32 // itemsize)          # 8 (f32) / 16 (bf16,f16) / 32 (i8)
    max_block_elems = max(sublane * 128, _TARGET_BLOCK_BYTES // itemsize)
    flat = x.reshape(-1)                      # contiguous reshape: free

    cost = pl.CostEstimate(flops=6 * n, transcendentals=n,
                           bytes_accessed=2 * n * itemsize)
    cparams = pltpu.CompilerParams(dimension_semantics=("parallel",))

    lane = _choose_lane(n)
    if lane is not None:
        # Main path: lane-dense 2-D slab, cdiv grid over rows, masked edge
        # block -- no wrapper pad/slice copies.
        rows = n // lane
        rb = _pick_row_block(rows, lane, sublane, max_block_elems)
        out = pl.pallas_call(
            _mish_kernel,
            out_shape=jax.ShapeDtypeStruct((rows, lane), dtype),
            grid_spec=pltpu.PrefetchScalarGridSpec(
                num_scalar_prefetch=0,
                grid=(pl.cdiv(rows, rb),),
                in_specs=[pl.BlockSpec((rb, lane), lambda i: (i, 0))],
                out_specs=pl.BlockSpec((rb, lane), lambda i: (i, 0)),
            ),
            compiler_params=cparams,
            cost_estimate=cost,
        )(flat.reshape(rows, lane))
        return out.reshape(orig_shape)

    # Fallback (n not a multiple of 128, e.g. odd prime shapes): flat 1-D
    # layout with a cdiv grid; the partial last block is masked by Pallas.
    # Purely elementwise, so garbage in the masked tail never reaches a write.
    blk = _FLAT_BLOCK_ELEMS
    if n >= 16 * 1024:
        blk = min(blk, max(1024, _round_down(n // 8, 1024)))   # >= ~8 steps
    if n <= blk:
        blk = n                              # single full-extent block (legal)
    out = pl.pallas_call(
        _mish_kernel,
        out_shape=jax.ShapeDtypeStruct((n,), dtype),
        grid_spec=pltpu.PrefetchScalarGridSpec(
            num_scalar_prefetch=0,
            grid=(pl.cdiv(n, blk),),
            in_specs=[pl.BlockSpec((blk,), lambda i: (i,))],
            out_specs=pl.BlockSpec((blk,), lambda i: (i,)),
        ),
        compiler_params=cparams,
        cost_estimate=cost,
    )(flat)
    return out.reshape(orig_shape)


def _mish_ref(x):
    xf = x.astype(jnp.float32)
    sp = jnp.where(xf > 20.0, xf, jnp.log1p(jnp.exp(jnp.minimum(xf, 20.0))))
    return (xf * jnp.tanh(sp)).astype(x.dtype)


if __name__ == "__main__":
    key = jax.random.PRNGKey(0)
    x = jax.random.normal(key, (2, 4, 16, 16), dtype=jnp.float32) * 3.0
    y = mish(x)
    jax.block_until_ready(y)
    assert y.shape == x.shape and y.dtype == x.dtype
    assert jnp.allclose(y, _mish_ref(x), atol=1e-5, rtol=1e-5)

    # Odd-sized input exercises the no-pad 1-D fallback path.
    x2 = jax.random.normal(jax.random.PRNGKey(1), (3, 5, 7, 11),
                           dtype=jnp.float32) * 3.0
    y2 = mish(x2)
    jax.block_until_ready(y2)
    assert jnp.allclose(y2, _mish_ref(x2), atol=1e-5, rtol=1e-5)

    # bf16 input exercises the 16-row sublane tile + approx-reciprocal path.
    x3 = (jax.random.normal(jax.random.PRNGKey(2), (2, 4, 32, 64),
                            dtype=jnp.float32) * 3.0).astype(jnp.bfloat16)
    y3 = mish(x3)
    jax.block_until_ready(y3)
    assert y3.shape == x3.shape and y3.dtype == jnp.bfloat16
    assert jnp.allclose(y3.astype(jnp.float32),
                        _mish_ref(x3).astype(jnp.float32),
                        atol=3e-2, rtol=3e-2)

    print("KERNEL_OK")
</pallas_src>

<mosaic_0001>
module attributes {stable_mosaic.version = 11 : i64} {
  func.func @_mish_kernel(%arg0: i32, %arg1: memref<2x1024xf32, #tpu.memory_space<vmem>>, %arg2: memref<2x1024xf32, #tpu.memory_space<vmem>>) attributes {dimension_semantics = [#tpu.dimension_semantics<parallel>], iteration_bounds = array<i64: 1>, scalar_prefetch = 0 : i64, scratch_operands = 0 : i64, tpu.core_type = #tpu.core_type<tc>, window_params = [{transform_indices = @transform_0, window_bounds = array<i64: 2, 1024>}, {transform_indices = @transform_1, window_bounds = array<i64: 2, 1024>}]} {
    %c0 = arith.constant 0 : index
    %c0_0 = arith.constant 0 : index
    %0 = vector.load %arg1[%c0, %c0_0] : memref<2x1024xf32, #tpu.memory_space<vmem>>, vector<2x1024xf32>
    %cst = arith.constant 2.000000e+01 : f32
    %1 = vector.broadcast %cst : f32 to vector<2x1024xf32>
    %2 = arith.minimumf %0, %1 : vector<2x1024xf32>
    %3 = math.exp %2 : vector<2x1024xf32>
    %cst_1 = arith.constant 2.000000e+00 : f32
    %4 = vector.broadcast %cst_1 : f32 to vector<2x1024xf32>
    %5 = arith.addf %3, %4 : vector<2x1024xf32>
    %6 = arith.mulf %3, %5 : vector<2x1024xf32>
    %cst_2 = arith.constant 2.000000e+00 : f32
    %7 = vector.broadcast %cst_2 : f32 to vector<2x1024xf32>
    %8 = arith.addf %6, %7 : vector<2x1024xf32>
    %9 = arith.divf %6, %8 : vector<2x1024xf32>
    %10 = arith.mulf %0, %9 : vector<2x1024xf32>
    %c0_3 = arith.constant 0 : index
    %c0_4 = arith.constant 0 : index
    %11 = vector.load %arg2[%c0_3, %c0_4] : memref<2x1024xf32, #tpu.memory_space<vmem>>, vector<2x1024xf32>
    tpu.vector_store %arg2[%c0_3, %c0_4], %10 {strides = array<i32>} : memref<2x1024xf32, #tpu.memory_space<vmem>>, vector<2x1024xf32>,
    return
  }
  func.func @transform_0(%arg0: i32) -> (i32, i32) {
    %c0_i32 = arith.constant 0 : i32
    %c0_i32_0 = arith.constant 0 : i32
    return %arg0, %c0_i32 : i32, i32
  }
  func.func @transform_1(%arg0: i32) -> (i32, i32) {
    %c0_i32 = arith.constant 0 : i32
    %c0_i32_0 = arith.constant 0 : i32
    return %arg0, %c0_i32 : i32, i32
  }
}

</mosaic_0001>

<llo_original>
// kernel: tpu_custom_call.1
$region0: #{tpu_custom_call.1}
  #allocation0 [shape = 'u32[]', space=smem, size = 0x4, offset = 0x4, fixed_abs, tag = 'smem constant byte address 0x4 - core index']
  #allocation1 [shape = 'u32[144,128]{1,0:T(1,128)}', space=vmem, size = 0x12000, scoped, tag = 'internal scratch']
  %s0 = inlined_call_operand.hbm [shape: f32[2,1024], index: 0, kind: input, shape index: {}]
  %s1 = inlined_call_operand.hbm [shape: f32[2,1024], index: 1, kind: output, shape index: {}]
  %s2 = sld [smem:[#allocation0]]
  $region18: #{tpu_custom_call.1} parent=0
    _
  %s4 = ssub.s32 1, %s2
  %s5 = scalar_select 0, %s4, %s2
  $region1: #{tpu_custom_call.1} parent=0
    #allocation2 [shape = 'u8[8192]{0}', space=vmem, size = 0x2000, scoped, tag = 'input window, operand 0, single buffered']
    #allocation3 [shape = 's32[1]{0}', space=sflag, size = 0x4, scoped, tag = 'scoped memory for tpu_custom_call.1']
    #allocation4 [shape = 's32[1]{0}', space=sflag, size = 0x4, scoped, tag = 'scoped memory for tpu_custom_call.1']
    #allocation5 [shape = 'u8[8192]{0}', space=vmem, size = 0x2000, scoped, tag = 'output window, operand 0, single buffered']
    %6 = vsyncpa [#allocation3], 0
    %7 = vsyncpa [#allocation4], 0
    // Predicated region
    $region2: #{tpu_custom_call.1} parent=1 // pred_check
      _
    $region3: #{tpu_custom_call.1} parent=1 // pred_check_branch
      %9 = sbr.rel (0) target = $region5
    $region4: #{tpu_custom_call.1} parent=1 // pred_region
      %s11 = ssub.s32 256, 256
      %12 = vsyncadd [#allocation3], %s11
      %s14 = sshll.u32 [#allocation2], 4
      %s15 = int_to_ptr.vmem [resolvable:$true] %s14
      %17 = dma.hbm_to_vmem [thread:$0]  %s0, 256, %s15, [#allocation3]
    $region5: #{tpu_custom_call.1} parent=1 // pred_fallthru
      _
    // Predicated region
    $region6: #{tpu_custom_call.1} parent=1 // pred_check
      _
    $region7: #{tpu_custom_call.1} parent=1 // pred_check_branch
      %19 = sbr.rel (0) target = $region9
    $region8: #{tpu_custom_call.1} parent=1 // pred_region
      %20 = dma.done [#allocation3], 256
    $region9: #{tpu_custom_call.1} parent=1 // pred_fallthru
      _
    %v21 = vld [vmem:[#allocation2] sm:$0xff]
    %v22 = vld [vmem:[#allocation2 + $0x8] sm:$0xff]
    %v23 = vmin.f32 %v21, 20.0
    %v24 = vmin.f32 %v22, 20.0
    %v25 = vmul.f32 %v23, 1.442695
    %v26 = vpow.pop %v25
    %v27 = vmul.f32 %v24, 1.442695
    %v28 = vpow.pop %v27
    %v29 = vadd.f32 %v26, 2.0
    %v30 = vadd.f32 %v28, 2.0
    %v31 = vmul.f32 %v26, %v29
    %v32 = vmul.f32 %v28, %v30
    %v33 = vadd.f32 %v31, 2.0
    %v34 = vadd.f32 %v32, 2.0
    %v35 = vrcp.pop %v33
    %v36 = vmul.f32 %v31, %v35
    %v37 = vrcp.pop %v34
    %v38 = vmul.f32 %v32, %v37
    %v39 = vmul.f32 %v21, %v36
    %v40 = vmul.f32 %v22, %v38
    %41 = vst [vmem:[#allocation5] sm:$0xff] %v39
    %42 = vst [vmem:[#allocation5 + $0x8] sm:$0xff] %v40
    // Predicated region
    $region10: #{tpu_custom_call.1} parent=1 // pred_check
      _
    $region11: #{tpu_custom_call.1} parent=1 // pred_check_branch
      %44 = sbr.rel (0) target = $region13
    $region12: #{tpu_custom_call.1} parent=1 // pred_region
      %s46 = ssub.s32 256, 256
      %47 = vsyncadd [#allocation4], %s46
      %s49 = sshll.u32 [#allocation5], 4
      %s50 = int_to_ptr.vmem [resolvable:$true] %s49
      %52 = dma.vmem_to_hbm [thread:$0]  %s50, 256, %s1, [#allocation4]
    $region13: #{tpu_custom_call.1} parent=1 // pred_fallthru
      _
    // Predicated region
    $region14: #{tpu_custom_call.1} parent=1 // pred_check
      _
    $region15: #{tpu_custom_call.1} parent=1 // pred_check_branch
      %54 = sbr.rel (0) target = $region17
    $region16: #{tpu_custom_call.1} parent=1 // pred_region
      %55 = dma.done [#allocation4], 256
    $region17: #{tpu_custom_call.1} parent=1 // pred_fallthru
      _
    %56 = vsyncpa [#allocation3], 1
    %57 = vsyncpa [#allocation4], 1

</llo_original>
